<compile_context>
chip_gen: v7x
topology: tpu7x:2x2x1
jax: 0.10.0
libtpu: 0.0.40
codegen_flags: <defaults>
</compile_context>

<pallas_src>
import functools

import jax
import jax.numpy as jnp
from jax.experimental import pallas as pl
from jax.experimental.pallas import tpu as pltpu


def _assemble_kernel(prefix_ref, ctx_ref, suffix_ref, out_ref, *, n_ctx):
    """[prefix | ctx | suffix] for a block of BC classes, via direct slice stores."""
    bc = out_ref.shape[0]
    out_ref[:, 0:1, :] = prefix_ref[...]
    ctx = ctx_ref[...]
    if ctx.ndim == 2:  # generic (shared) context -> broadcast over the class block
        ctx = jnp.broadcast_to(ctx[None], (bc,) + ctx.shape)
    out_ref[:, 1:1 + n_ctx, :] = ctx.astype(out_ref.dtype)
    out_ref[:, 1 + n_ctx:, :] = suffix_ref[...]


def _ctx_update_kernel(ctx_ref, head_ref, out_ref, *, n_ctx):
    """Aliased fast path: copy the head rows and overwrite rows [1, 1+n_ctx) with ctx."""
    bc = out_ref.shape[0]
    out_ref[...] = head_ref[...]
    ctx = ctx_ref[...]
    if ctx.ndim == 2:
        ctx = jnp.broadcast_to(ctx[None], (bc,) + ctx.shape)
    out_ref[:, 1:1 + n_ctx, :] = ctx.astype(out_ref.dtype)


def _vmem_capped_class_block(n_cls, rows_per_class, ctx_dim, itemsize,
                             requested, budget_bytes=8 << 20):
    # in + out tiles, double-buffered -> ~4x rows_per_class x ctx_dim per class.
    per_class = 4 * rows_per_class * ctx_dim * itemsize
    cap = max(1, budget_bytes // max(1, per_class))
    return int(max(1, min(requested, cap, n_cls)))


def prompt_learner_forward(ctx, token_prefix, token_suffix, *, class_block=8):
    """PromptLearner.forward (class_token_position='end') as a Pallas kernel.

    Args:
      ctx:          (n_ctx, D) generic context, or (n_cls, n_ctx, D) class-specific (CSC).
      token_prefix: (n_cls, 1, D)
      token_suffix: (n_cls, n_suf, D)
    Returns:
      prompts: (n_cls, 1 + n_ctx + n_suf, D), dtype of token_prefix.
    """
    n_cls, _, ctx_dim = token_prefix.shape
    n_suf = token_suffix.shape[1]
    n_ctx = ctx.shape[-2]
    seq_len = 1 + n_ctx + n_suf
    dtype = token_prefix.dtype
    itemsize = jnp.dtype(dtype).itemsize

    bc = _vmem_capped_class_block(n_cls, 2 * seq_len, ctx_dim, itemsize, class_block)
    grid = (pl.cdiv(n_cls, bc),)

    if ctx.ndim == 3:  # class-specific context
        ctx_spec = pl.BlockSpec((bc, n_ctx, ctx_dim), lambda i: (i, 0, 0))
    else:              # generic context: single block, stays resident in VMEM (no re-DMA)
        ctx_spec = pl.BlockSpec((n_ctx, ctx_dim), lambda i: (0, 0))

    return pl.pallas_call(
        functools.partial(_assemble_kernel, n_ctx=n_ctx),
        out_shape=jax.ShapeDtypeStruct((n_cls, seq_len, ctx_dim), dtype),
        grid=grid,
        in_specs=[
            pl.BlockSpec((bc, 1, ctx_dim), lambda i: (i, 0, 0)),
            ctx_spec,
            pl.BlockSpec((bc, n_suf, ctx_dim), lambda i: (i, 0, 0)),
        ],
        out_specs=pl.BlockSpec((bc, seq_len, ctx_dim), lambda i: (i, 0, 0)),
        compiler_params=pltpu.CompilerParams(dimension_semantics=("parallel",)),
    )(token_prefix, ctx, token_suffix)


def prompt_learner_forward_inplace(ctx, embedding, *, class_block=8):
    """Fast path when the caller holds the full token `embedding`.

    prompts == embedding with sequence rows [1, 1+n_ctx) replaced by ctx.  The embedding
    buffer is aliased to the output, and only the first HEAD (8/16-row aligned) rows per
    class are read/written; the remaining (suffix) rows of the aliased buffer are never
    touched and keep their original values, so only ~HEAD/seq_len of the bytes move.
    """
    n_cls, seq_len, ctx_dim = embedding.shape
    n_ctx = ctx.shape[-2]
    dtype = embedding.dtype
    itemsize = jnp.dtype(dtype).itemsize
    # sublane alignment for this dtype: 8 rows @4B, 16 @2B (bf16), 32 @1B.
    sub = 8 * max(1, 4 // itemsize)
    head = min(-(-(1 + n_ctx) // sub) * sub, seq_len)

    bc = _vmem_capped_class_block(n_cls, 2 * head, ctx_dim, itemsize, class_block)
    grid = (pl.cdiv(n_cls, bc),)

    if ctx.ndim == 3:
        ctx_spec = pl.BlockSpec((bc, n_ctx, ctx_dim), lambda i: (i, 0, 0))
    else:
        ctx_spec = pl.BlockSpec((n_ctx, ctx_dim), lambda i: (0, 0))
    head_spec = pl.BlockSpec((bc, head, ctx_dim), lambda i: (i, 0, 0))

    return pl.pallas_call(
        functools.partial(_ctx_update_kernel, n_ctx=n_ctx),
        out_shape=jax.ShapeDtypeStruct((n_cls, seq_len, ctx_dim), dtype),
        grid=grid,
        in_specs=[ctx_spec, head_spec],
        out_specs=head_spec,
        input_output_aliases={1: 0},  # embedding buffer reused as the output
        compiler_params=pltpu.CompilerParams(dimension_semantics=("parallel",)),
    )(ctx, embedding)


if __name__ == "__main__":
    # Small, deterministic synthetic setup consistent with the module:
    # n_cls classes, n_ctx learnable context tokens, lane-dense embedding dim.
    n_cls, n_ctx, ctx_dim, seq_len = 16, 4, 128, 24
    n_suffix = seq_len - 1 - n_ctx
    dtype = jnp.float32

    key = jax.random.PRNGKey(0)
    k_ctx, k_csc, k_emb = jax.random.split(key, 3)

    # nn.init.normal_(ctx_vectors, std=0.02): generic and class-specific variants.
    ctx_generic = 0.02 * jax.random.normal(k_ctx, (n_ctx, ctx_dim), dtype=dtype)
    ctx_csc = 0.02 * jax.random.normal(k_csc, (n_cls, n_ctx, ctx_dim), dtype=dtype)

    # Synthetic token_embedding(tokenized_prompts); prefix/suffix are contiguous slices.
    embedding = jax.random.normal(k_emb, (n_cls, seq_len, ctx_dim), dtype=dtype)
    token_prefix = embedding[:, :1, :]           # (n_cls, 1, D)
    token_suffix = embedding[:, 1 + n_ctx:, :]   # (n_cls, n_suffix, D)

    # --- generic (shared) context, 'end' position ---
    out_gen = jax.block_until_ready(
        prompt_learner_forward(ctx_generic, token_prefix, token_suffix))
    ref_gen = jnp.concatenate(
        [token_prefix,
         jnp.broadcast_to(ctx_generic[None], (n_cls, n_ctx, ctx_dim)),
         token_suffix], axis=1)
    assert out_gen.shape == (n_cls, seq_len, ctx_dim) and out_gen.dtype == dtype
    assert jnp.allclose(out_gen, ref_gen), "generic-ctx mismatch vs. reference"

    # --- class-specific context (CSC) ---
    out_csc = jax.block_until_ready(
        prompt_learner_forward(ctx_csc, token_prefix, token_suffix))
    ref_csc = jnp.concatenate([token_prefix, ctx_csc, token_suffix], axis=1)
    assert jnp.allclose(out_csc, ref_csc), "csc-ctx mismatch vs. reference"

    # --- aliased in-place fast path (caller still holds the full embedding) ---
    out_alias = jax.block_until_ready(
        prompt_learner_forward_inplace(ctx_generic, embedding))
    assert out_alias.shape == (n_cls, seq_len, ctx_dim) and out_alias.dtype == dtype
    assert jnp.allclose(out_alias, ref_gen), "aliased fast-path mismatch vs. reference"

    print("KERNEL_OK")
</pallas_src>

<mosaic_0001>
module attributes {stable_mosaic.version = 11 : i64} {
  func.func @_assemble_kernel(%arg0: i32, %arg1: memref<8x1x128xf32, #tpu.memory_space<vmem>>, %arg2: memref<4x128xf32, #tpu.memory_space<vmem>>, %arg3: memref<8x19x128xf32, #tpu.memory_space<vmem>>, %arg4: memref<8x24x128xf32, #tpu.memory_space<vmem>>) attributes {dimension_semantics = [#tpu.dimension_semantics<parallel>], iteration_bounds = array<i64: 2>, scalar_prefetch = 0 : i64, scratch_operands = 0 : i64, tpu.core_type = #tpu.core_type<tc>, window_params = [{transform_indices = @transform_0, window_bounds = array<i64: 8, 1, 128>}, {pipeline_mode = #tpu.pipeline_mode<synchronous>, transform_indices = @transform_1, window_bounds = array<i64: 4, 128>}, {transform_indices = @transform_2, window_bounds = array<i64: 8, 19, 128>}, {transform_indices = @transform_3, window_bounds = array<i64: 8, 24, 128>}]} {
    %c0 = arith.constant 0 : index
    %c0_0 = arith.constant 0 : index
    %c0_1 = arith.constant 0 : index
    %0 = vector.load %arg1[%c0, %c0_0, %c0_1] : memref<8x1x128xf32, #tpu.memory_space<vmem>>, vector<8x1x128xf32>
    %c0_2 = arith.constant 0 : index
    %c0_3 = arith.constant 0 : index
    %c0_4 = arith.constant 0 : index
    %1 = vector.load %arg4[%c0_2, %c0_3, %c0_4] : memref<8x24x128xf32, #tpu.memory_space<vmem>>, vector<8x1x128xf32>
    tpu.vector_store %arg4[%c0_2, %c0_3, %c0_4], %0 {strides = array<i32>} : memref<8x24x128xf32, #tpu.memory_space<vmem>>, vector<8x1x128xf32>,
    %c0_5 = arith.constant 0 : index
    %c0_6 = arith.constant 0 : index
    %2 = vector.load %arg2[%c0_5, %c0_6] : memref<4x128xf32, #tpu.memory_space<vmem>>, vector<4x128xf32>
    %3 = vector.shape_cast %2 : vector<4x128xf32> to vector<1x4x128xf32>
    %4 = vector.shape_cast %3 : vector<1x4x128xf32> to vector<1x4x128xf32>
    %5 = vector.broadcast %4 : vector<1x4x128xf32> to vector<8x4x128xf32>
    %c0_7 = arith.constant 0 : index
    %c1 = arith.constant 1 : index
    %c0_8 = arith.constant 0 : index
    %6 = vector.load %arg4[%c0_7, %c1, %c0_8] : memref<8x24x128xf32, #tpu.memory_space<vmem>>, vector<8x4x128xf32>
    tpu.vector_store %arg4[%c0_7, %c1, %c0_8], %5 {strides = array<i32>} : memref<8x24x128xf32, #tpu.memory_space<vmem>>, vector<8x4x128xf32>,
    %c0_9 = arith.constant 0 : index
    %c0_10 = arith.constant 0 : index
    %c0_11 = arith.constant 0 : index
    %7 = vector.load %arg3[%c0_9, %c0_10, %c0_11] : memref<8x19x128xf32, #tpu.memory_space<vmem>>, vector<8x19x128xf32>
    %c0_12 = arith.constant 0 : index
    %c5 = arith.constant 5 : index
    %c0_13 = arith.constant 0 : index
    %8 = vector.load %arg4[%c0_12, %c5, %c0_13] : memref<8x24x128xf32, #tpu.memory_space<vmem>>, vector<8x19x128xf32>
    tpu.vector_store %arg4[%c0_12, %c5, %c0_13], %7 {strides = array<i32>} : memref<8x24x128xf32, #tpu.memory_space<vmem>>, vector<8x19x128xf32>,
    return
  }
  func.func @transform_0(%arg0: i32) -> (i32, i32, i32) {
    %c0_i32 = arith.constant 0 : i32
    %c0_i32_0 = arith.constant 0 : i32
    %c0_i32_1 = arith.constant 0 : i32
    return %arg0, %c0_i32, %c0_i32_0 : i32, i32, i32
  }
  func.func @transform_1(%arg0: i32) -> (i32, i32) {
    %c0_i32 = arith.constant 0 : i32
    %c0_i32_0 = arith.constant 0 : i32
    %c0_i32_1 = arith.constant 0 : i32
    return %c0_i32, %c0_i32_0 : i32, i32
  }
  func.func @transform_2(%arg0: i32) -> (i32, i32, i32) {
    %c0_i32 = arith.constant 0 : i32
    %c0_i32_0 = arith.constant 0 : i32
    %c0_i32_1 = arith.constant 0 : i32
    return %arg0, %c0_i32, %c0_i32_0 : i32, i32, i32
  }
  func.func @transform_3(%arg0: i32) -> (i32, i32, i32) {
    %c0_i32 = arith.constant 0 : i32
    %c0_i32_0 = arith.constant 0 : i32
    %c0_i32_1 = arith.constant 0 : i32
    return %arg0, %c0_i32, %c0_i32_0 : i32, i32, i32
  }
}

</mosaic_0001>

<llo_original>
// kernel: tpu_custom_call.1
$region0: #{tpu_custom_call.1}
  #allocation0 [shape = 'u32[]', space=smem, size = 0x4, offset = 0x4, fixed_abs, tag = 'smem constant byte address 0x4 - core index']
  #allocation1 [shape = 'u32[144,128]{1,0:T(1,128)}', space=vmem, size = 0x12000, scoped, tag = 'internal scratch']
  %s0 = inlined_call_operand.vmem [shape: f32[16,1,128], index: 0, kind: input, shape index: {}]
  %s1 = inlined_call_operand.vmem [shape: f32[4,128], index: 1, kind: input, shape index: {}]
  %s2 = inlined_call_operand.vmem [shape: f32[16,19,128], index: 2, kind: input, shape index: {}]
  %s3 = inlined_call_operand.hbm [shape: f32[16,24,128], index: 3, kind: output, shape index: {}]
  %s4 = sld [smem:[#allocation0]]
  $region45: #{tpu_custom_call.1} parent=0
    _
  %s6 = ssub.s32 1, %s4
  %s7 = scalar_select 0, %s6, %s4
  $region1: #{tpu_custom_call.1} parent=0
    #allocation2 [shape = 'u8[196608]{0}', space=vmem, size = 0x30000, scoped, tag = 'output window, operand 0']
    #allocation3 [shape = 's32[2]{0}', space=sflag, size = 0x8, scoped, tag = 'scoped memory for tpu_custom_call.1']
    %8 = vsyncpa [#allocation3], 0
    %s9 = scalar_lea.sflag [#allocation3], 1
    %10 = vsyncpa %s9, 0
    loop: start=0, step=1, limit=4
    $region2: #{tpu_custom_call.1} parent=1 // loop_pre_header
      _
    $region3: #{tpu_custom_call.1} parent=1 // loop_header
      %s12 = sphi 0, %s16
      %p13 = scmp.ge.s32.totalorder %s12, 4
      %s22 = sphi 0, %s24
      %s25 = sphi 0, %s22
      %s26 = sphi 0, %s25
      %s42 = sphi 0, %s26
      %s46 = sphi 0, %s46
      %s48 = sphi 0, %s46
      %s49 = sphi 0, %s48
      %s63 = sphi 0, %s49
      %s69 = sphi 0, %s71
      %s72 = sphi 0, %s69
      %s73 = sphi 0, %s72
      %s89 = sphi 0, %s73
      %s95 = sphi 0, %s97
      %s98 = sphi 0, %s95
      %s99 = sphi 0, %s98
      %s115 = sphi 0, %s99
    $region4: #{tpu_custom_call.1} parent=1 // loop_header_branch
      %15 = sbr.rel (%p13) target = $region8
    $region5: #{tpu_custom_call.1} parent=1 // loop_body
      %s17 = ssub.s32 %s12, 1
      %s18 = ssub.s32 %s12, 2
      %s19 = sadd.s32 %s12, 1
      %s20 = ssub.s32 %s12, %s19
      %p21 = scmp.eq.s32.totalorder %s20, 0
      %s23 = sadd.s32 %s22, 1
      %s24 = scalar_select %p21, %s22, %s23
      %p27 = pneg %p21
      %p28 = scmp.eq.s32.totalorder %s12, 1
      %p29 = por %p27, %p28
      %p30 = scmp.ne.s32.totalorder %s22, %s25
      %p31 = scmp.eq.s32.totalorder %s12, 0
      %p32 = por %p30, %p31
      %p33 = scmp.ne.s32.totalorder %s22, %s25
      %p34 = scmp.eq.s32.totalorder %s17, 1
      %p35 = por %p33, %p34
      %p36 = scmp.ne.s32.totalorder %s25, %s26
      %p37 = scmp.eq.s32.totalorder %s17, 0
      %p38 = por %p36, %p37
      %p39 = scmp.ne.s32.totalorder %s25, %s26
      %p40 = scmp.eq.s32.totalorder %s18, 1
      %p41 = por %p39, %p40
      %p43 = scmp.ne.s32.totalorder %s26, %s42
      %p44 = scmp.eq.s32.totalorder %s18, 0
      %p45 = por %p43, %p44
      %s47 = sadd.s32 %s46, 1
      %p50 = scmp.eq.s32.totalorder %s12, 1
      %p51 = scmp.ne.s32.totalorder %s46, %s48
      %p52 = scmp.eq.s32.totalorder %s12, 0
      %p53 = por %p51, %p52
      %p54 = scmp.ne.s32.totalorder %s46, %s48
      %p55 = scmp.eq.s32.totalorder %s17, 1
      %p56 = por %p54, %p55
      %p57 = scmp.ne.s32.totalorder %s48, %s49
      %p58 = scmp.eq.s32.totalorder %s17, 0
      %p59 = por %p57, %p58
      %p60 = scmp.ne.s32.totalorder %s48, %s49
      %p61 = scmp.eq.s32.totalorder %s18, 1
      %p62 = por %p60, %p61
      %p64 = scmp.ne.s32.totalorder %s49, %s63
      %p65 = scmp.eq.s32.totalorder %s18, 0
      %p66 = por %p64, %p65
      %s67 = ssub.s32 %s12, %s19
      %p68 = scmp.eq.s32.totalorder %s67, 0
      %s70 = sadd.s32 %s69, 1
      %s71 = scalar_select %p68, %s69, %s70
      %p74 = pneg %p68
      %p75 = scmp.eq.s32.totalorder %s12, 1
      %p76 = por %p74, %p75
      %p77 = scmp.ne.s32.totalorder %s69, %s72
      %p78 = scmp.eq.s32.totalorder %s12, 0
      %p79 = por %p77, %p78
      %p80 = scmp.ne.s32.totalorder %s69, %s72
      %p81 = scmp.eq.s32.totalorder %s17, 1
      %p82 = por %p80, %p81
      %p83 = scmp.ne.s32.totalorder %s72, %s73
      %p84 = scmp.eq.s32.totalorder %s17, 0
      %p85 = por %p83, %p84
      %p86 = scmp.ne.s32.totalorder %s72, %s73
      %p87 = scmp.eq.s32.totalorder %s18, 1
      %p88 = por %p86, %p87
      %p90 = scmp.ne.s32.totalorder %s73, %s89
      %p91 = scmp.eq.s32.totalorder %s18, 0
      %p92 = por %p90, %p91
      %s93 = ssub.s32 %s12, %s19
      %p94 = scmp.eq.s32.totalorder %s93, 0
      %s96 = sadd.s32 %s95, 1
      %s97 = scalar_select %p94, %s95, %s96
      %p100 = pneg %p94
      %p101 = scmp.eq.s32.totalorder %s12, 1
      %p102 = por %p100, %p101
      %p103 = scmp.ne.s32.totalorder %s95, %s98
      %p104 = scmp.eq.s32.totalorder %s12, 0
      %p105 = por %p103, %p104
      %p106 = scmp.ne.s32.totalorder %s95, %s98
      %p107 = scmp.eq.s32.totalorder %s17, 1
      %p108 = por %p106, %p107
      %p109 = scmp.ne.s32.totalorder %s98, %s99
      %p110 = scmp.eq.s32.totalorder %s17, 0
      %p111 = por %p109, %p110
      %p112 = scmp.ne.s32.totalorder %s98, %s99
      %p113 = scmp.eq.s32.totalorder %s18, 1
      %p114 = por %p112, %p113
      %p116 = scmp.ne.s32.totalorder %s99, %s115
      %p117 = scmp.eq.s32.totalorder %s18, 0
      %p118 = por %p116, %p117
      %p119 = scmp.le.s32.totalorder 1, %s12
      %p120 = scmp.lt.s32.totalorder %s12, 3
      %p121 = pnand %p119, %p120
      %p122 = pneg %p121
      // Predicated region
      $region9: #{tpu_custom_call.1} parent=5 // pred_check
        _
      $region10: #{tpu_custom_call.1} parent=5 // pred_check_branch
        %124 = sbr.rel (%p121) target = $region12
      $region11: #{tpu_custom_call.1} parent=5 // pred_region
        %s125 = ssub.s32 %s12, 1
        // Predicated region
        $region13: #{tpu_custom_call.1} parent=11 // pred_check
          %p126 = pneg %p59
        $region14: #{tpu_custom_call.1} parent=11 // pred_check_branch
          %128 = sbr.rel (%p126) target = $region16
        $region15: #{tpu_custom_call.1} parent=11 // pred_region
          _
        $region16: #{tpu_custom_call.1} parent=11 // pred_fallthru
          _
      $region12: #{tpu_custom_call.1} parent=5 // pred_fallthru
        _
      %p129 = scmp.lt.s32.totalorder %s12, 2
      // Predicated region
      $region17: #{tpu_custom_call.1} parent=5 // pred_check
        %p130 = pneg %p129
      $region18: #{tpu_custom_call.1} parent=5 // pred_check_branch
        %132 = sbr.rel (%p130) target = $region20
      $region19: #{tpu_custom_call.1} parent=5 // pred_region
        // Predicated region
        $region21: #{tpu_custom_call.1} parent=19 // pred_check
          %p133 = pneg %p32
        $region22: #{tpu_custom_call.1} parent=19 // pred_check_branch
          %135 = sbr.rel (%p133) target = $region24
        $region23: #{tpu_custom_call.1} parent=19 // pred_region
          %s136 = smul.u32 8, %s12
          %p137 = scmp.lt.s32.totalorder %s136, 15
          %s138 = scalar_select %p137, %s136, 15
          %s139 = scalar_lea.vmem %s0, %s138
          %s140 = smul.u32 8, %s12
        $region24: #{tpu_custom_call.1} parent=19 // pred_fallthru
          _
        // Predicated region
        $region25: #{tpu_custom_call.1} parent=19 // pred_check
          %p141 = pneg %p79
        $region26: #{tpu_custom_call.1} parent=19 // pred_check_branch
          %143 = sbr.rel (%p141) target = $region28
        $region27: #{tpu_custom_call.1} parent=19 // pred_region
          %s144 = smul.u32 8, %s12
          %p145 = scmp.lt.s32.totalorder %s144, 15
          %s146 = scalar_select %p145, %s144, 15
          %s147 = smul.addr %s146, 3
          %s148 = smul.addr %s147, 8
          %s149 = scalar_lea.vmem %s2, %s148
          %s150 = smul.u32 8, %s12
        $region28: #{tpu_custom_call.1} parent=19 // pred_fallthru
          _
      $region20: #{tpu_custom_call.1} parent=5 // pred_fallthru
        _
      %p151 = scmp.le.s32.totalorder 1, %s12
      %p152 = scmp.lt.s32.totalorder %s12, 3
      %p153 = pnand %p151, %p152
      %p154 = pneg %p153
      // Predicated region
      $region29: #{tpu_custom_call.1} parent=5 // pred_check
        _
      $region30: #{tpu_custom_call.1} parent=5 // pred_check_branch
        %156 = sbr.rel (%p153) target = $region32
      $region31: #{tpu_custom_call.1} parent=5 // pred_region
        %s157 = ssub.s32 %s12, 1
        %s158 = smul.u32 8, %s17
        %p159 = scmp.lt.s32.totalorder %s158, 15
        %s160 = scalar_select %p159, %s158, 15
        %s161 = scalar_lea.vmem %s0, %s160
        %p162 = pneg %p38
        %p163 = pneg %p35
        %p164 = pneg %p59
        %p165 = pneg %p56
        %s166 = smul.u32 8, %s17
        %p167 = scmp.lt.s32.totalorder %s166, 15
        %s168 = scalar_select %p167, %s166, 15
        %s169 = smul.addr %s168, 3
        %s170 = smul.addr %s169, 8
        %s171 = scalar_lea.vmem %s2, %s170
        %p172 = pneg %p85
        %p173 = pneg %p82
        %p174 = pneg %p111
        %p175 = pneg %p108
        %s176 = sand.u32 %s98, 1
        %s177 = scalar_lea.sflag [#allocation3], %s176
        %s178 = sand.u32 %s98, 1
        %s179 = smul.addr %s178, 192
        %s180 = scalar_lea.vmem [#allocation2], %s179
        %s181 = smul.u32 8, %s17
        %p182 = scmp.lt.s32.totalorder %s181, 15
        %s183 = scalar_select %p182, %s181, 15
        %s184 = scalar_lea.vmem %s0, %s183
        %s185 = smul.u32 8, %s17
        %s186 = smul.u32 8, %s17
        %p187 = scmp.lt.s32.totalorder %s186, 15
        %s188 = scalar_select %p187, %s186, 15
        %s189 = smul.addr %s188, 3
        %s190 = smul.addr %s189, 8
        %s191 = scalar_lea.vmem %s2, %s190
        %s192 = smul.u32 8, %s17
        %s193 = smul.u32 8, %s17
        %v194 = vld [vmem:[%s184] sm:$0x1]
        %v195 = vld [vmem:[%s184 + $0x1] sm:$0x1]
        %v196 = vld [vmem:[%s184 + $0x2] sm:$0x1]
        %v197 = vld [vmem:[%s184 + $0x3] sm:$0x1]
        %v198 = vld [vmem:[%s184 + $0x4] sm:$0x1]
        %v199 = vld [vmem:[%s184 + $0x5] sm:$0x1]
        %v200 = vld [vmem:[%s184 + $0x6] sm:$0x1]
        %v201 = vld [vmem:[%s184 + $0x7] sm:$0x1]
        %202 = vst [vmem:[%s180] sm:$0x1] %v194
        %203 = vst [vmem:[%s180 + $0x18] sm:$0x1] %v195
        %204 = vst [vmem:[%s180 + $0x30] sm:$0x1] %v196
        %205 = vst [vmem:[%s180 + $0x48] sm:$0x1] %v197
        %206 = vst [vmem:[%s180 + $0x60] sm:$0x1] %v198
        %207 = vst [vmem:[%s180 + $0x78] sm:$0x1] %v199
        %208 = vst [vmem:[%s180 + $0x90] sm:$0x1] %v200
        %209 = vst [vmem:[%s180 + $0xa8] sm:$0x1] %v201
        %v210 = vld [vmem:[%s1] sm:$0xf]
        %211 = vst [vmem:[%s180 + $0x1] sm:$0xf] %v210
        %212 = vst [vmem:[%s180 + $0x19] sm:$0xf] %v210
        %213 = vst [vmem:[%s180 + $0x31] sm:$0xf] %v210
        %214 = vst [vmem:[%s180 + $0x49] sm:$0xf] %v210
        %215 = vst [vmem:[%s180 + $0x61] sm:$0xf] %v210
        %216 = vst [vmem:[%s180 + $0x79] sm:$0xf] %v210
        %217 = vst [vmem:[%s180 + $0x91] sm:$0xf] %v210
        %218 = vst [vmem:[%s180 + $0xa9] sm:$0xf] %v210
        %v219 = vld [vmem:[%s191] sm:$0xff]
        %v220 = vld [vmem:[%s191 + $0x8] sm:$0xff]
        %v221 = vld [vmem:[%s191 + $0x10] sm:$0x7]
        %v222 = vld [vmem:[%s191 + $0x18] sm:$0xff]
        %v223 = vld [vmem:[%s191 + $0x20] sm:$0xff]
        %v224 = vld [vmem:[%s191 + $0x28] sm:$0x7]
        %v225 = vld [vmem:[%s191 + $0x30] sm:$0xff]
        %v226 = vld [vmem:[%s191 + $0x38] sm:$0xff]
        %v227 = vld [vmem:[%s191 + $0x40] sm:$0x7]
        %v228 = vld [vmem:[%s191 + $0x48] sm:$0xff]
        %v229 = vld [vmem:[%s191 + $0x50] sm:$0xff]
        %v230 = vld [vmem:[%s191 + $0x58] sm:$0x7]
        %v231 = vld [vmem:[%s191 + $0x60] sm:$0xff]
        %v232 = vld [vmem:[%s191 + $0x68] sm:$0xff]
        %v233 = vld [vmem:[%s191 + $0x70] sm:$0x7]
        %v234 = vld [vmem:[%s191 + $0x78] sm:$0xff]
        %v235 = vld [vmem:[%s191 + $0x80] sm:$0xff]
        %v236 = vld [vmem:[%s191 + $0x88] sm:$0x7]
        %v237 = vld [vmem:[%s191 + $0x90] sm:$0xff]
        %v238 = vld [vmem:[%s191 + $0x98] sm:$0xff]
        %v239 = vld [vmem:[%s191 + $0xa0] sm:$0x7]
        %v240 = vld [vmem:[%s191 + $0xa8] sm:$0xff]
        %v241 = vld [vmem:[%s191 + $0xb0] sm:$0xff]
        %v242 = vld [vmem:[%s191 + $0xb8] sm:$0x7]
        %243 = vst [vmem:[%s180 + $0x5] sm:$0xff] %v219
        %244 = vst [vmem:[%s180 + $0xd] sm:$0xff] %v220
        %245 = vst [vmem:[%s180 + $0x15] sm:$0x7] %v221
        %246 = vst [vmem:[%s180 + $0x1d] sm:$0xff] %v222
        %247 = vst [vmem:[%s180 + $0x25] sm:$0xff] %v223
        %248 = vst [vmem:[%s180 + $0x2d] sm:$0x7] %v224
        %249 = vst [vmem:[%s180 + $0x35] sm:$0xff] %v225
        %250 = vst [vmem:[%s180 + $0x3d] sm:$0xff] %v226
        %251 = vst [vmem:[%s180 + $0x45] sm:$0x7] %v227
        %252 = vst [vmem:[%s180 + $0x4d] sm:$0xff] %v228
        %253 = vst [vmem:[%s180 + $0x55] sm:$0xff] %v229
        %254 = vst [vmem:[%s180 + $0x5d] sm:$0x7] %v230
        %255 = vst [vmem:[%s180 + $0x65] sm:$0xff] %v231
        %256 = vst [vmem:[%s180 + $0x6d] sm:$0xff] %v232
        %257 = vst [vmem:[%s180 + $0x75] sm:$0x7] %v233
        %258 = vst [vmem:[%s180 + $0x7d] sm:$0xff] %v234
        %259 = vst [vmem:[%s180 + $0x85] sm:$0xff] %v235
        %260 = vst [vmem:[%s180 + $0x8d] sm:$0x7] %v236
        %261 = vst [vmem:[%s180 + $0x95] sm:$0xff] %v237
        %262 = vst [vmem:[%s180 + $0x9d] sm:$0xff] %v238
        %263 = vst [vmem:[%s180 + $0xa5] sm:$0x7] %v239
        %264 = vst [vmem:[%s180 + $0xad] sm:$0xff] %v240
        %265 = vst [vmem:[%s180 + $0xb5] sm:$0xff] %v241
        %266 = vst [vmem:[%s180 + $0xbd] sm:$0x7] %v242
        %s267 = sand.u32 %s98, 1
        %s268 = scalar_lea.sflag [#allocation3], %s267
        %s269 = sand.u32 %s98, 1
        %s270 = smul.addr %s269, 192
        %s271 = scalar_lea.vmem [#allocation2], %s270
        // Predicated region
        $region33: #{tpu_custom_call.1} parent=31 // pred_check
          %p272 = pneg %p108
        $region34: #{tpu_custom_call.1} parent=31 // pred_check_branch
          %274 = sbr.rel (%p272) target = $region36
        $region35: #{tpu_custom_call.1} parent=31 // pred_region
          %s275 = smul.u32 8, %s17
          %s277 = ssub.s32 3072, 3072
          %278 = vsyncadd %s268, %s277
          %s279 = smul.addr %s275, 3
          %s280 = smul.addr %s279, 128
          %s281 = scalar_lea.hbm %s3, %s280
          %s282 = sshll.u32 %s271, 4
          %s283 = int_to_ptr.vmem [resolvable:$true] %s282
          %288 = dma.vmem_to_hbm [thread:$0]  %s283, 3072, %s281, %s268, 128, 128, 8
        $region36: #{tpu_custom_call.1} parent=31 // pred_fallthru
          _
      $region32: #{tpu_custom_call.1} parent=5 // pred_fallthru
        _
      %p289 = scmp.le.s32.totalorder 2, %s12
      // Predicated region
      $region37: #{tpu_custom_call.1} parent=5 // pred_check
        %p290 = pneg %p289
      $region38: #{tpu_custom_call.1} parent=5 // pred_check_branch
        %292 = sbr.rel (%p290) target = $region40
      $region39: #{tpu_custom_call.1} parent=5 // pred_region
        %s293 = ssub.s32 %s12, 2
        // Predicated region
        $region41: #{tpu_custom_call.1} parent=39 // pred_check
          %p294 = pneg %p114
        $region42: #{tpu_custom_call.1} parent=39 // pred_check_branch
          %296 = sbr.rel (%p294) target = $region44
        $region43: #{tpu_custom_call.1} parent=39 // pred_region
          %s297 = sand.u32 %s99, 1
          %s298 = scalar_lea.sflag [#allocation3], %s297
          %s299 = sand.u32 %s99, 1
          %s300 = smul.addr %s299, 192
          %s301 = scalar_lea.vmem [#allocation2], %s300
          %302 = dma.done %s298, 3072
        $region44: #{tpu_custom_call.1} parent=39 // pred_fallthru
          _
      $region40: #{tpu_custom_call.1} parent=5 // pred_fallthru
        _
    $region6: #{tpu_custom_call.1} parent=1 // loop_footer
      %s16 = sadd.s32 1, %s12
    $region7: #{tpu_custom_call.1} parent=1 // loop_footer_branch
      %11 = sbr.rel target = $region3
    $region8: #{tpu_custom_call.1} parent=1 // loop_exit
      _
    %303 = vsyncpa [#allocation3], 1
    %s304 = scalar_lea.sflag [#allocation3], 1
    %305 = vsyncpa %s304, 1

</llo_original>
